<compile_context>
chip_gen: v5e
topology: v5e:2x2
jax: 0.10.0
libtpu: 0.0.40
codegen_flags: <defaults>
</compile_context>

<pallas_src>
import functools

import numpy as np

import jax
import jax.numpy as jnp
from jax.experimental import pallas as pl
from jax.experimental.pallas import tpu as pltpu

PR = 2.5
SIZE = 5
PAD = (SIZE - 1) // 2        # 2
NTAPS = 2 * PAD + 1          # 5
# log(0.5 / nominater) with nominater = (size**2) ** (1/pr); folded into exp() below.
_LOG_HALF_INV_NOM = float(np.log(0.5) - (1.0 / PR) * np.log(SIZE * SIZE))


def _reflect_index(m, dim):
    if m < 0:
        m = -m
    if m >= dim:
        m = 2 * (dim - 1) - m
    return m


def _w_tap_coeffs(h, w):
    """(NTAPS, h*w) f32 tap coefficients for the W-direction reflect-padded 5-tap sum.

    c[t, i*w + j] = #{m in [j-PAD, j+PAD] : reflect(m, w) == j + (t - PAD)}.
    Guaranteed 0 whenever j + (t - PAD) falls outside [0, w), so lane reads that
    spill into the neighbouring row contribute exactly 0.
    """
    c = np.zeros((NTAPS, w), np.float32)
    for j in range(w):
        for m in range(j - PAD, j + PAD + 1):
            r = _reflect_index(m, w)
            c[r - j + PAD, j] += 1.0
    return np.tile(c, (1, h))


def _rgem_kernel(c_ref, x_ref, o_ref, buf_ref, *, h, w):
    # c_ref:   (NTAPS, L)           W-direction tap coefficients (L = H*W)
    # x_ref:   (TB, L)              TB flattened input planes (lane-dense)
    # o_ref:   (TB, L)              output planes
    # buf_ref: (TB, L + 2*PAD*W)    scratch row buffer: [H border | payload | H border]
    l = h * w
    off = PAD * w  # border width (in lanes) on each side of the payload

    # Post-ReLU precondition made robust: clamp tiny negatives so sqrt stays finite.
    x = jnp.maximum(x_ref[...].astype(jnp.float32), 0.0)
    # x ** 2.5 == x * x * sqrt(x)   (VPU muls + one EUP op, no pow)
    xpp = x * x * jnp.sqrt(x)

    # ---- reflect-pad along H directly in the flat buffer (each row = w lanes).
    buf_ref[:, off:off + l] = xpp
    for p in range(PAD):
        # padded row (-1 - p)  <-  source row (1 + p)
        buf_ref[:, off - (p + 1) * w: off - p * w] = xpp[:, (p + 1) * w:(p + 2) * w]
        # padded row (h + p)   <-  source row (h - 2 - p)
        buf_ref[:, off + l + p * w: off + l + (p + 1) * w] = (
            xpp[:, l - (p + 2) * w: l - (p + 1) * w])

    # ---- separable 5-tap sum, H direction: plain adds of lane-shifted views.
    s1 = buf_ref[:, 0:l]                                     # d = -PAD (offset 0)
    for d in range(-PAD + 1, PAD + 1):
        s1 = s1 + buf_ref[:, off + d * w: off + d * w + l]

    # ---- separable 5-tap sum, W direction, reflection folded into coefficients.
    #      Lane reads that cross a row boundary hit finite neighbouring data and are
    #      multiplied by a 0 coefficient.
    buf_ref[:, off:off + l] = s1
    acc = c_ref[0:1, :] * buf_ref[:, off - PAD: off - PAD + l]
    for t in range(1, NTAPS):
        d = t - PAD
        acc = acc + c_ref[t:t + 1, :] * buf_ref[:, off + d: off + d + l]

    # (sum x**p) ** (1/p) with the /nominater prescale and the 0.5 blend weight
    # folded into the exponent: exp(log(acc)/p + log(0.5/nom)).  acc == 0 -> 0.
    pooled = jnp.exp(jnp.log(acc) * (1.0 / PR) + _LOG_HALF_INV_NOM)
    o_ref[...] = (pooled + 0.5 * x).astype(o_ref.dtype)


def _round_up(v, m):
    return (v + m - 1) // m * m


def _vmem_budget_and_limit():
    """Generation-aware VMEM budget / compiler limit (bytes)."""
    cap = 64 << 20  # conservative (v7x-sized) fallback
    try:
        info = pltpu.get_tpu_info()
        cap = int(getattr(info, "vmem_capacity_bytes", cap))
    except Exception:
        pass
    if cap >= (96 << 20):          # v5e / v6e: 128 MiB physical VMEM
        return 44 << 20, 64 << 20
    return 22 << 20, 32 << 20      # v7x: 64 MiB per TensorCore


def _choose_tb(b, h, w, budget_bytes):
    """Planes per grid step, accounting for (8, 128) VMEM tile padding."""
    l = h * w
    l_pad = _round_up(l, 128)
    lbuf_pad = _round_up(l + 2 * PAD * w, 128)
    # Per-plane f32 bytes: double-buffered in + out blocks, the row buffer, and
    # ~4 live intermediate value arrays of slack.
    per_plane = 4 * (2 * l_pad + 2 * l_pad + lbuf_pad + 4 * l_pad)
    fixed = 4 * 2 * 8 * l_pad      # coefficient block (NTAPS -> 8 sublanes), 2 buffers
    tb = max(1, (budget_bytes - fixed) // per_plane)
    # Keep a single block to ~4 MiB so the software pipeline stays fine-grained.
    tb = min(tb, max(1, (4 << 20) // (4 * l_pad)))
    if b > 8:
        # Target >= 8 grid steps (>= 4 per TensorCore on a 2-core chip) for overlap.
        tb = min(tb, max(8, b // 8))
        tb = max(8, tb - tb % 8)   # sublane-aligned block rows (second-minor dim)
    else:
        tb = b                     # single full-extent block satisfies the (8,128) rule
    est_bytes = fixed + per_plane * tb
    return tb, est_bytes


def rgem(x):
    """x: (N, C, H, W) float array (post-ReLU / non-negative). Same shape & dtype out."""
    n, c, h, w = x.shape
    assert h >= PAD + 1 and w >= PAD + 1, (
        f"rgem requires H, W >= {PAD + 1} (ReflectionPad2d({PAD})), got {(h, w)}")
    b, l = n * c, h * w
    x_flat = x.reshape(b, l)                      # zero-copy: each plane is contiguous
    coeffs = jnp.asarray(_w_tap_coeffs(h, w))     # (NTAPS, L) f32, tiny, VMEM-resident

    budget, vmem_limit = _vmem_budget_and_limit()
    tb, est_bytes = _choose_tb(b, h, w, budget)
    # Corner-case guard (enormous planes forcing the 8-row sublane floor): raise the
    # limit to the estimated need instead of failing at the default.
    vmem_limit = max(vmem_limit, min(int(est_bytes * 1.25) + (1 << 20), 128 << 20))
    grid = pl.cdiv(b, tb)          # partial last block allowed; OOB writes are dropped

    kernel = functools.partial(_rgem_kernel, h=h, w=w)
    out = pl.pallas_call(
        kernel,
        out_shape=jax.ShapeDtypeStruct((b, l), x.dtype),
        grid_spec=pltpu.PrefetchScalarGridSpec(
            num_scalar_prefetch=0,
            grid=(grid,),
            in_specs=[
                pl.BlockSpec((NTAPS, l), lambda i: (0, 0)),   # tap coefficients
                pl.BlockSpec((tb, l), lambda i: (i, 0)),      # lane-dense input planes
            ],
            out_specs=pl.BlockSpec((tb, l), lambda i: (i, 0)),
            scratch_shapes=[
                pltpu.VMEM((tb, l + 2 * PAD * w), jnp.float32),
            ],
        ),
        compiler_params=pltpu.CompilerParams(
            dimension_semantics=("parallel",),
            vmem_limit_bytes=vmem_limit,
        ),
    )(coeffs, x_flat)

    return out.reshape(n, c, h, w)


def _rgem_ref(x):
    """Pure-JAX reference of the PyTorch forward (for non-negative inputs)."""
    n, c, h, w = x.shape
    nominater = (SIZE ** 2) ** (1.0 / PR)
    xs = x / nominater
    xp = jnp.pad(xs, ((0, 0), (0, 0), (PAD, PAD), (PAD, PAD)), mode="reflect")
    xp_p = jnp.power(xp, PR)
    acc = jnp.zeros_like(x)
    for di in range(SIZE):
        for dj in range(SIZE):
            acc = acc + xp_p[:, :, di:di + h, dj:dj + w]
    pooled = jnp.power(acc, 1.0 / PR)
    return 0.5 * pooled + 0.5 * x


if __name__ == "__main__":
    key = jax.random.PRNGKey(0)

    # Primary test: NCHW feature map (post-ReLU -> non-negative), b = 8 planes.
    x = jax.random.uniform(key, (2, 4, 16, 16), dtype=jnp.float32)
    y = jax.block_until_ready(rgem(x))
    y_ref = _rgem_ref(x)
    assert y.shape == x.shape and y.dtype == x.dtype
    assert jnp.allclose(y, y_ref, atol=2e-5, rtol=2e-5)

    # Unaligned H, W (13x17) and an odd, small plane count (tb == b path).
    x2 = jax.random.uniform(jax.random.PRNGKey(0), (1, 3, 13, 17), dtype=jnp.float32)
    y2 = jax.block_until_ready(rgem(x2))
    y2_ref = _rgem_ref(x2)
    assert y2.shape == x2.shape and y2.dtype == x2.dtype
    assert jnp.allclose(y2, y2_ref, atol=2e-5, rtol=2e-5)

    # Multi-step grid with a partial last block (b = 18 planes, tb = 8, grid = 3).
    x3 = jax.random.uniform(jax.random.PRNGKey(1), (2, 9, 16, 16), dtype=jnp.float32)
    y3 = jax.block_until_ready(rgem(x3))
    y3_ref = _rgem_ref(x3)
    assert y3.shape == x3.shape and y3.dtype == x3.dtype
    assert jnp.allclose(y3, y3_ref, atol=2e-5, rtol=2e-5)

    print("KERNEL_OK")
</pallas_src>

<mosaic_0001>
module attributes {stable_mosaic.version = 11 : i64} {
  func.func @_rgem_kernel(%arg0: i32, %arg1: memref<5x256xf32, #tpu.memory_space<vmem>>, %arg2: memref<8x256xf32, #tpu.memory_space<vmem>>, %arg3: memref<8x256xf32, #tpu.memory_space<vmem>>, %arg4: memref<8x320xf32, #tpu.memory_space<vmem>>) attributes {dimension_semantics = [#tpu.dimension_semantics<parallel>], iteration_bounds = array<i64: 1>, scalar_prefetch = 0 : i64, scratch_operands = 1 : i64, tpu.core_type = #tpu.core_type<tc>, window_params = [{pipeline_mode = #tpu.pipeline_mode<synchronous>, transform_indices = @transform_0, window_bounds = array<i64: 5, 256>}, {transform_indices = @transform_1, window_bounds = array<i64: 8, 256>}, {transform_indices = @transform_2, window_bounds = array<i64: 8, 256>}]} {
    %c0 = arith.constant 0 : index
    %c0_0 = arith.constant 0 : index
    %0 = vector.load %arg2[%c0, %c0_0] : memref<8x256xf32, #tpu.memory_space<vmem>>, vector<8x256xf32>
    %cst = arith.constant 0.000000e+00 : f32
    %1 = vector.broadcast %cst : f32 to vector<8x256xf32>
    %2 = arith.maximumf %0, %1 : vector<8x256xf32>
    %3 = arith.mulf %2, %2 : vector<8x256xf32>
    %4 = math.sqrt %2 : vector<8x256xf32>
    %5 = arith.mulf %3, %4 : vector<8x256xf32>
    %c0_1 = arith.constant 0 : index
    %c32 = arith.constant 32 : index
    %6 = vector.load %arg4[%c0_1, %c32] : memref<8x320xf32, #tpu.memory_space<vmem>>, vector<8x256xf32>
    tpu.vector_store %arg4[%c0_1, %c32], %5 {strides = array<i32>} : memref<8x320xf32, #tpu.memory_space<vmem>>, vector<8x256xf32>,
    %7 = vector.extract_strided_slice %5 {offsets = [0, 16], sizes = [8, 16], strides = [1, 1]} : vector<8x256xf32> to vector<8x16xf32>
    %c0_2 = arith.constant 0 : index
    %c16 = arith.constant 16 : index
    %8 = vector.load %arg4[%c0_2, %c16] : memref<8x320xf32, #tpu.memory_space<vmem>>, vector<8x16xf32>
    tpu.vector_store %arg4[%c0_2, %c16], %7 {strides = array<i32>} : memref<8x320xf32, #tpu.memory_space<vmem>>, vector<8x16xf32>,
    %9 = vector.extract_strided_slice %5 {offsets = [0, 224], sizes = [8, 16], strides = [1, 1]} : vector<8x256xf32> to vector<8x16xf32>
    %c0_3 = arith.constant 0 : index
    %c288 = arith.constant 288 : index
    %10 = vector.load %arg4[%c0_3, %c288] : memref<8x320xf32, #tpu.memory_space<vmem>>, vector<8x16xf32>
    tpu.vector_store %arg4[%c0_3, %c288], %9 {strides = array<i32>} : memref<8x320xf32, #tpu.memory_space<vmem>>, vector<8x16xf32>,
    %11 = vector.extract_strided_slice %5 {offsets = [0, 32], sizes = [8, 16], strides = [1, 1]} : vector<8x256xf32> to vector<8x16xf32>
    %c0_4 = arith.constant 0 : index
    %c0_5 = arith.constant 0 : index
    %12 = vector.load %arg4[%c0_4, %c0_5] : memref<8x320xf32, #tpu.memory_space<vmem>>, vector<8x16xf32>
    tpu.vector_store %arg4[%c0_4, %c0_5], %11 {strides = array<i32>} : memref<8x320xf32, #tpu.memory_space<vmem>>, vector<8x16xf32>,
    %13 = vector.extract_strided_slice %5 {offsets = [0, 208], sizes = [8, 16], strides = [1, 1]} : vector<8x256xf32> to vector<8x16xf32>
    %c0_6 = arith.constant 0 : index
    %c304 = arith.constant 304 : index
    %14 = vector.load %arg4[%c0_6, %c304] : memref<8x320xf32, #tpu.memory_space<vmem>>, vector<8x16xf32>
    tpu.vector_store %arg4[%c0_6, %c304], %13 {strides = array<i32>} : memref<8x320xf32, #tpu.memory_space<vmem>>, vector<8x16xf32>,
    %c0_7 = arith.constant 0 : index
    %c0_8 = arith.constant 0 : index
    %15 = vector.load %arg4[%c0_7, %c0_8] : memref<8x320xf32, #tpu.memory_space<vmem>>, vector<8x256xf32>
    %c0_9 = arith.constant 0 : index
    %c16_10 = arith.constant 16 : index
    %16 = vector.load %arg4[%c0_9, %c16_10] : memref<8x320xf32, #tpu.memory_space<vmem>>, vector<8x256xf32>
    %17 = arith.addf %15, %16 : vector<8x256xf32>
    %c0_11 = arith.constant 0 : index
    %c32_12 = arith.constant 32 : index
    %18 = vector.load %arg4[%c0_11, %c32_12] : memref<8x320xf32, #tpu.memory_space<vmem>>, vector<8x256xf32>
    %19 = arith.addf %17, %18 : vector<8x256xf32>
    %c0_13 = arith.constant 0 : index
    %c48 = arith.constant 48 : index
    %20 = vector.load %arg4[%c0_13, %c48] : memref<8x320xf32, #tpu.memory_space<vmem>>, vector<8x256xf32>
    %21 = arith.addf %19, %20 : vector<8x256xf32>
    %c0_14 = arith.constant 0 : index
    %c64 = arith.constant 64 : index
    %22 = vector.load %arg4[%c0_14, %c64] : memref<8x320xf32, #tpu.memory_space<vmem>>, vector<8x256xf32>
    %23 = arith.addf %21, %22 : vector<8x256xf32>
    %c0_15 = arith.constant 0 : index
    %c32_16 = arith.constant 32 : index
    %24 = vector.load %arg4[%c0_15, %c32_16] : memref<8x320xf32, #tpu.memory_space<vmem>>, vector<8x256xf32>
    tpu.vector_store %arg4[%c0_15, %c32_16], %23 {strides = array<i32>} : memref<8x320xf32, #tpu.memory_space<vmem>>, vector<8x256xf32>,
    %c0_17 = arith.constant 0 : index
    %c0_18 = arith.constant 0 : index
    %25 = vector.load %arg1[%c0_17, %c0_18] : memref<5x256xf32, #tpu.memory_space<vmem>>, vector<1x256xf32>
    %c0_19 = arith.constant 0 : index
    %c30 = arith.constant 30 : index
    %26 = vector.load %arg4[%c0_19, %c30] : memref<8x320xf32, #tpu.memory_space<vmem>>, vector<8x256xf32>
    %27 = vector.broadcast %25 : vector<1x256xf32> to vector<8x256xf32>
    %28 = arith.mulf %27, %26 : vector<8x256xf32>
    %c1 = arith.constant 1 : index
    %c0_20 = arith.constant 0 : index
    %29 = vector.load %arg1[%c1, %c0_20] : memref<5x256xf32, #tpu.memory_space<vmem>>, vector<1x256xf32>
    %c0_21 = arith.constant 0 : index
    %c31 = arith.constant 31 : index
    %30 = vector.load %arg4[%c0_21, %c31] : memref<8x320xf32, #tpu.memory_space<vmem>>, vector<8x256xf32>
    %31 = vector.broadcast %29 : vector<1x256xf32> to vector<8x256xf32>
    %32 = arith.mulf %31, %30 : vector<8x256xf32>
    %33 = arith.addf %28, %32 : vector<8x256xf32>
    %c2 = arith.constant 2 : index
    %c0_22 = arith.constant 0 : index
    %34 = vector.load %arg1[%c2, %c0_22] : memref<5x256xf32, #tpu.memory_space<vmem>>, vector<1x256xf32>
    %c0_23 = arith.constant 0 : index
    %c32_24 = arith.constant 32 : index
    %35 = vector.load %arg4[%c0_23, %c32_24] : memref<8x320xf32, #tpu.memory_space<vmem>>, vector<8x256xf32>
    %36 = vector.broadcast %34 : vector<1x256xf32> to vector<8x256xf32>
    %37 = arith.mulf %36, %35 : vector<8x256xf32>
    %38 = arith.addf %33, %37 : vector<8x256xf32>
    %c3 = arith.constant 3 : index
    %c0_25 = arith.constant 0 : index
    %39 = vector.load %arg1[%c3, %c0_25] : memref<5x256xf32, #tpu.memory_space<vmem>>, vector<1x256xf32>
    %c0_26 = arith.constant 0 : index
    %c33 = arith.constant 33 : index
    %40 = vector.load %arg4[%c0_26, %c33] : memref<8x320xf32, #tpu.memory_space<vmem>>, vector<8x256xf32>
    %41 = vector.broadcast %39 : vector<1x256xf32> to vector<8x256xf32>
    %42 = arith.mulf %41, %40 : vector<8x256xf32>
    %43 = arith.addf %38, %42 : vector<8x256xf32>
    %c4 = arith.constant 4 : index
    %c0_27 = arith.constant 0 : index
    %44 = vector.load %arg1[%c4, %c0_27] : memref<5x256xf32, #tpu.memory_space<vmem>>, vector<1x256xf32>
    %c0_28 = arith.constant 0 : index
    %c34 = arith.constant 34 : index
    %45 = vector.load %arg4[%c0_28, %c34] : memref<8x320xf32, #tpu.memory_space<vmem>>, vector<8x256xf32>
    %46 = vector.broadcast %44 : vector<1x256xf32> to vector<8x256xf32>
    %47 = arith.mulf %46, %45 : vector<8x256xf32>
    %48 = arith.addf %43, %47 : vector<8x256xf32>
    %49 = math.log %48 : vector<8x256xf32>
    %cst_29 = arith.constant 4.000000e-01 : f32
    %50 = vector.broadcast %cst_29 : f32 to vector<8x256xf32>
    %51 = arith.mulf %49, %50 : vector<8x256xf32>
    %cst_30 = arith.constant -1.98069751 : f32
    %52 = vector.broadcast %cst_30 : f32 to vector<8x256xf32>
    %53 = arith.addf %51, %52 : vector<8x256xf32>
    %54 = math.exp %53 : vector<8x256xf32>
    %cst_31 = arith.constant 5.000000e-01 : f32
    %55 = vector.broadcast %cst_31 : f32 to vector<8x256xf32>
    %56 = arith.mulf %55, %2 : vector<8x256xf32>
    %57 = arith.addf %54, %56 : vector<8x256xf32>
    %c0_32 = arith.constant 0 : index
    %c0_33 = arith.constant 0 : index
    %58 = vector.load %arg3[%c0_32, %c0_33] : memref<8x256xf32, #tpu.memory_space<vmem>>, vector<8x256xf32>
    tpu.vector_store %arg3[%c0_32, %c0_33], %57 {strides = array<i32>} : memref<8x256xf32, #tpu.memory_space<vmem>>, vector<8x256xf32>,
    return
  }
  func.func @transform_0(%arg0: i32) -> (i32, i32) {
    %c0_i32 = arith.constant 0 : i32
    %c0_i32_0 = arith.constant 0 : i32
    %c0_i32_1 = arith.constant 0 : i32
    return %c0_i32, %c0_i32_0 : i32, i32
  }
  func.func @transform_1(%arg0: i32) -> (i32, i32) {
    %c0_i32 = arith.constant 0 : i32
    %c0_i32_0 = arith.constant 0 : i32
    return %arg0, %c0_i32 : i32, i32
  }
  func.func @transform_2(%arg0: i32) -> (i32, i32) {
    %c0_i32 = arith.constant 0 : i32
    %c0_i32_0 = arith.constant 0 : i32
    return %arg0, %c0_i32 : i32, i32
  }
}

</mosaic_0001>

<llo_original>
// kernel: tpu_custom_call.1
$region0: #{tpu_custom_call.1}
  #allocation0 [shape = 'u32[]', space=smem, size = 0x4, offset = 0x4, fixed_abs, tag = 'smem constant byte address 0x4 - core index']
  #allocation1 [shape = 'u32[72,128]{1,0:T(1,128)}', space=vmem, size = 0x9000, scoped, tag = 'internal scratch']
  #allocation2 [shape = 'f32[8,320]{1,0:T(8,128)}', space=vmem, size = 0x3000, scoped, tag = 'scratch operand']
  %s0 = inlined_call_operand.hbm [shape: f32[5,256], index: 0, kind: input, shape index: {}]
  %s1 = inlined_call_operand.hbm [shape: f32[8,256], index: 1, kind: input, shape index: {}]
  %s2 = inlined_call_operand.hbm [shape: f32[8,256], index: 2, kind: output, shape index: {}]
  %s3 = sld [smem:[#allocation0]]
  $region26: #{tpu_custom_call.1} parent=0
    _
  %s5 = ssub.s32 1, %s3
  %s6 = scalar_select 0, %s5, %s3
  $region1: #{tpu_custom_call.1} parent=0
    #allocation3 [shape = 'u8[8192]{0}', space=vmem, size = 0x2000, scoped, tag = 'input window, operand 0, single buffered']
    #allocation4 [shape = 's32[1]{0}', space=sflag, size = 0x4, scoped, tag = 'scoped memory for tpu_custom_call.1']
    #allocation5 [shape = 's32[1]{0}', space=sflag, size = 0x4, scoped, tag = 'scoped memory for tpu_custom_call.1']
    #allocation6 [shape = 'u8[8192]{0}', space=vmem, size = 0x2000, scoped, tag = 'input window, operand 1, single buffered']
    #allocation7 [shape = 's32[1]{0}', space=sflag, size = 0x4, scoped, tag = 'scoped memory for tpu_custom_call.1']
    #allocation8 [shape = 'u8[8192]{0}', space=vmem, size = 0x2000, scoped, tag = 'output window, operand 0, single buffered']
    %7 = vsyncpa [#allocation4], 0
    %8 = vsyncpa [#allocation7], 0
    %9 = vsyncpa [#allocation5], 0
    // Predicated region
    $region2: #{tpu_custom_call.1} parent=1 // pred_check
      _
    $region3: #{tpu_custom_call.1} parent=1 // pred_check_branch
      %11 = sbr.rel (0) target = $region5
    $region4: #{tpu_custom_call.1} parent=1 // pred_region
      %13 = vsyncadd [#allocation4], 0
      %s15 = sshll.u32 %s0, 4
      %s16 = int_to_ptr.hbm [resolvable:$true] %s15
      %s17 = sshll.u32 [#allocation3], 4
      %s18 = int_to_ptr.vmem [resolvable:$true] %s17
      %20 = dma.hbm_to_vmem [thread:$0]  %s16, 256, %s18, [#allocation4]
    $region5: #{tpu_custom_call.1} parent=1 // pred_fallthru
      _
    // Predicated region
    $region6: #{tpu_custom_call.1} parent=1 // pred_check
      _
    $region7: #{tpu_custom_call.1} parent=1 // pred_check_branch
      %22 = sbr.rel (0) target = $region9
    $region8: #{tpu_custom_call.1} parent=1 // pred_region
      %24 = vsyncadd [#allocation7], 0
      %s26 = sshll.u32 %s1, 4
      %s27 = int_to_ptr.hbm [resolvable:$true] %s26
      %s28 = sshll.u32 [#allocation6], 4
      %s29 = int_to_ptr.vmem [resolvable:$true] %s28
      %31 = dma.hbm_to_vmem [thread:$0]  %s27, 256, %s29, [#allocation7]
    $region9: #{tpu_custom_call.1} parent=1 // pred_fallthru
      _
    // Predicated region
    $region10: #{tpu_custom_call.1} parent=1 // pred_check
      _
    $region11: #{tpu_custom_call.1} parent=1 // pred_check_branch
      %33 = sbr.rel (0) target = $region13
    $region12: #{tpu_custom_call.1} parent=1 // pred_region
      %35 = dma.done [#allocation4], 256
    $region13: #{tpu_custom_call.1} parent=1 // pred_fallthru
      _
    // Predicated region
    $region14: #{tpu_custom_call.1} parent=1 // pred_check
      _
    $region15: #{tpu_custom_call.1} parent=1 // pred_check_branch
      %37 = sbr.rel (0) target = $region17
    $region16: #{tpu_custom_call.1} parent=1 // pred_region
      %39 = dma.done [#allocation7], 256
    $region17: #{tpu_custom_call.1} parent=1 // pred_fallthru
      _
    %v40 = vld [vmem:[#allocation6] sm:$0xff]
    %v41 = vld [vmem:[#allocation6 + $0x8] sm:$0xff]
    %v42 = vmax.f32 %v40, 0.0
    %v43 = vmax.f32 %v41, 0.0
    %v44 = vmul.f32 %v42, %v42
    %v45 = vmul.f32 %v43, %v43
    %v46 = vrsqrt.pop %v42
    %v47 = vmul.f32 %v46, %v42
    %v48 = vmul.f32 %v47, %v46
    %v49 = vmul.f32 0.5, %v48
    %v50 = vsub.f32 1.5, %v49
    %v51 = vmul.f32 %v46, %v50
    %v52 = vmul.f32 %v42, %v51
    %vm53 = vcmp.eq.f32.partialorder %v42, inf
    %v54 = vsel %vm53, %v42, %v52
    %vm55 = vcmp.eq.f32.partialorder %v42, 0.0
    %v56 = vand.u32 %v42, 2147483648
    %v57 = vsel %vm55, %v56, %v54
    %v58 = vrsqrt.pop %v43
    %v59 = vmul.f32 %v58, %v43
    %v60 = vmul.f32 %v59, %v58
    %v61 = vmul.f32 0.5, %v60
    %v62 = vsub.f32 1.5, %v61
    %v63 = vmul.f32 %v58, %v62
    %v64 = vmul.f32 %v43, %v63
    %vm65 = vcmp.eq.f32.partialorder %v43, inf
    %v66 = vsel %vm65, %v43, %v64
    %vm67 = vcmp.eq.f32.partialorder %v43, 0.0
    %v68 = vand.u32 %v43, 2147483648
    %v69 = vsel %vm67, %v68, %v66
    %v70 = vmul.f32 %v44, %v57
    %v71 = vmul.f32 %v45, %v69
    %74 = vrot.lane.b32.xlu0 %v70, 32
    %v75 = vpop.permute.xlu0 %74
    %76 = vrot.lane.b32.xlu0 %v71, 32
    %v77 = vpop.permute.xlu0 %76
    %vm78 = vcmask 261120
    %v79 = vsel %vm78, %v75, %v77
    %vm83 = vcmask 1047808
    %84 = vst.msk [vmem:[#allocation2] sm:$0xff] %vm83, %v75
    %85 = vst [vmem:[#allocation2 + $0x8] sm:$0xff] %v79
    %86 = vst.msk [vmem:[#allocation2 + $0x10] sm:$0xff] %vm78, %v77
    %vm87 = vcmask 261248
    %88 = vst.msk [vmem:[#allocation2] sm:$0xff] %vm87, %v70
    %89 = vrot.lane.b32.xlu0 %v71, 64
    %v90 = vpop.permute.xlu0 %89
    %vm92 = vcmask 392448
    %93 = vst.msk [vmem:[#allocation2 + $0x10] sm:$0xff] %vm92, %v90
    %94 = vrot.lane.b32.xlu0 %v70, 96
    %v95 = vpop.permute.xlu0 %94
    %vm97 = vcmask 130048
    %98 = vst.msk [vmem:[#allocation2] sm:$0xff] %vm97, %v95
    %99 = vrot.lane.b32.xlu0 %v71, 96
    %v100 = vpop.permute.xlu0 %99
    %vm102 = vcmask 523648
    %103 = vst.msk [vmem:[#allocation2 + $0x10] sm:$0xff] %vm102, %v100
    %v104 = vld [vmem:[#allocation2] sm:$0xff]
    %v105 = vld [vmem:[#allocation2 + $0x8] sm:$0xff]
    %v106 = vld [vmem:[#allocation2 + $0x10] sm:$0xff]
    %110 = vrot.lane.b32.xlu0 %v104, 112
    %v111 = vpop.permute.xlu0 %110
    %112 = vrot.lane.b32.xlu0 %v105, 112
    %v113 = vpop.permute.xlu0 %112
    %114 = vrot.lane.b32.xlu0 %v106, 112
    %v115 = vpop.permute.xlu0 %114
    %vm116 = vcmask 916480
    %v117 = vsel %vm116, %v111, %v113
    %v118 = vsel %vm116, %v113, %v115
    %v121 = vadd.f32 %v104, %v117
    %v122 = vadd.f32 %v105, %v118
    %123 = vrot.lane.b32.xlu0 %v104, 96
    %v124 = vpop.permute.xlu0 %123
    %125 = vrot.lane.b32.xlu0 %v105, 96
    %v126 = vpop.permute.xlu0 %125
    %127 = vrot.lane.b32.xlu0 %v106, 96
    %v128 = vpop.permute.xlu0 %127
    %vm129 = vcmask 785408
    %v130 = vsel %vm129, %v124, %v126
    %v131 = vsel %vm129, %v126, %v128
    %v134 = vadd.f32 %v121, %v130
    %v135 = vadd.f32 %v122, %v131
    %136 = vrot.lane.b32.xlu0 %v104, 80
    %v137 = vpop.permute.xlu0 %136
    %138 = vrot.lane.b32.xlu0 %v105, 80
    %v139 = vpop.permute.xlu0 %138
    %140 = vrot.lane.b32.xlu0 %v106, 80
    %v141 = vpop.permute.xlu0 %140
    %vm142 = vcmask 654336
    %v143 = vsel %vm142, %v137, %v139
    %v144 = vsel %vm142, %v139, %v141
    %v147 = vadd.f32 %v134, %v143
    %v148 = vadd.f32 %v135, %v144
    %149 = vrot.lane.b32.xlu0 %v104, 64
    %v150 = vpop.permute.xlu0 %149
    %151 = vrot.lane.b32.xlu0 %v105, 64
    %v152 = vpop.permute.xlu0 %151
    %153 = vrot.lane.b32.xlu0 %v106, 64
    %v154 = vpop.permute.xlu0 %153
    %vm155 = vcmask 523264
    %v156 = vsel %vm155, %v150, %v152
    %v157 = vsel %vm155, %v152, %v154
    %v160 = vadd.f32 %v147, %v156
    %v161 = vadd.f32 %v148, %v157
    %164 = vrot.lane.b32.xlu0 %v160, 32
    %v165 = vpop.permute.xlu0 %164
    %166 = vrot.lane.b32.xlu0 %v161, 32
    %v167 = vpop.permute.xlu0 %166
    %v168 = vsel %vm78, %v165, %v167
    %172 = vst.msk [vmem:[#allocation2] sm:$0xff] %vm83, %v165
    %173 = vst [vmem:[#allocation2 + $0x8] sm:$0xff] %v168
    %174 = vst.msk [vmem:[#allocation2 + $0x10] sm:$0xff] %vm78, %v167
    %v175 = vld [vmem:[#allocation3] ss:$8 sm:$0x3]
    %v176 = vld [vmem:[#allocation2] sm:$0xff]
    %v177 = vld [vmem:[#allocation2 + $0x8] sm:$0xff]
    %v178 = vld [vmem:[#allocation2 + $0x10] sm:$0xff]
    %v180 = vperm.slane %v175, 0
    %v181 = vperm.slane %v175, 1
    %187 = vrot.lane.b32.xlu0 %v176, 98
    %v188 = vpop.permute.xlu0 %187
    %189 = vrot.lane.b32.xlu0 %v177, 98
    %v190 = vpop.permute.xlu0 %189
    %191 = vrot.lane.b32.xlu0 %v178, 98
    %v192 = vpop.permute.xlu0 %191
    %vm193 = vcmask 801792
    %v194 = vsel %vm193, %v188, %v190
    %v195 = vsel %vm193, %v190, %v192
    %v198 = vmul.f32 %v180, %v194
    %v199 = vmul.f32 %v181, %v195
    %s200 = scalar_lea.vmem [#allocation3], 1
    %v201 = vld [vmem:[%s200] ss:$8 sm:$0x3]
    %v203 = vperm.slane %v201, 0
    %v204 = vperm.slane %v201, 1
    %207 = vrot.lane.b32.xlu0 %v176, 97
    %v208 = vpop.permute.xlu0 %207
    %209 = vrot.lane.b32.xlu0 %v177, 97
    %v210 = vpop.permute.xlu0 %209
    %211 = vrot.lane.b32.xlu0 %v178, 97
    %v212 = vpop.permute.xlu0 %211
    %vm213 = vcmask 793600
    %v214 = vsel %vm213, %v208, %v210
    %v215 = vsel %vm213, %v210, %v212
    %v218 = vmul.f32 %v203, %v214
    %v219 = vmul.f32 %v204, %v215
    %v220 = vadd.f32 %v198, %v218
    %v221 = vadd.f32 %v199, %v219
    %s222 = scalar_lea.vmem [#allocation3], 2
    %v223 = vld [vmem:[%s222] ss:$8 sm:$0x3]
    %v225 = vperm.slane %v223, 0
    %v226 = vperm.slane %v223, 1
    %229 = vrot.lane.b32.xlu0 %v176, 96
    %v230 = vpop.permute.xlu0 %229
    %231 = vrot.lane.b32.xlu0 %v177, 96
    %v232 = vpop.permute.xlu0 %231
    %233 = vrot.lane.b32.xlu0 %v178, 96
    %v234 = vpop.permute.xlu0 %233
    %v235 = vsel %vm129, %v230, %v232
    %v236 = vsel %vm129, %v232, %v234
    %v239 = vmul.f32 %v225, %v235
    %v240 = vmul.f32 %v226, %v236
    %v241 = vadd.f32 %v220, %v239
    %v242 = vadd.f32 %v221, %v240
    %s243 = scalar_lea.vmem [#allocation3], 3
    %v244 = vld [vmem:[%s243] ss:$8 sm:$0x3]
    %v246 = vperm.slane %v244, 0
    %v247 = vperm.slane %v244, 1
    %250 = vrot.lane.b32.xlu0 %v176, 95
    %v251 = vpop.permute.xlu0 %250
    %252 = vrot.lane.b32.xlu0 %v177, 95
    %v253 = vpop.permute.xlu0 %252
    %254 = vrot.lane.b32.xlu0 %v178, 95
    %v255 = vpop.permute.xlu0 %254
    %vm256 = vcmask 777216
    %v257 = vsel %vm256, %v251, %v253
    %v258 = vsel %vm256, %v253, %v255
    %v261 = vmul.f32 %v246, %v257
    %v262 = vmul.f32 %v247, %v258
    %v263 = vadd.f32 %v241, %v261
    %v264 = vadd.f32 %v242, %v262
    %s265 = scalar_lea.vmem [#allocation3], 4
    %v266 = vld [vmem:[%s265] ss:$8 sm:$0x3]
    %v268 = vperm.slane %v266, 0
    %v269 = vperm.slane %v266, 1
    %272 = vrot.lane.b32.xlu0 %v176, 94
    %v273 = vpop.permute.xlu0 %272
    %274 = vrot.lane.b32.xlu0 %v177, 94
    %v275 = vpop.permute.xlu0 %274
    %276 = vrot.lane.b32.xlu0 %v178, 94
    %v277 = vpop.permute.xlu0 %276
    %vm278 = vcmask 769024
    %v279 = vsel %vm278, %v273, %v275
    %v280 = vsel %vm278, %v275, %v277
    %v283 = vmul.f32 %v268, %v279
    %v284 = vmul.f32 %v269, %v280
    %v285 = vadd.f32 %v263, %v283
    %v286 = vadd.f32 %v264, %v284
    %v287 = vlog2.pop %v285
    %v288 = vmul.f32 %v287, 0.6931472
    %v289 = vlog2.pop %v286
    %v290 = vmul.f32 %v289, 0.6931472
    %v291 = vmul.f32 %v288, 0.4
    %v292 = vmul.f32 %v290, 0.4
    %v293 = vadd.f32 %v291, -1.9806975
    %v294 = vadd.f32 %v292, -1.9806975
    %v295 = vmul.f32 %v293, 1.442695
    %v296 = vpow.pop %v295
    %v297 = vmul.f32 %v294, 1.442695
    %v298 = vpow.pop %v297
    %v299 = vmul.f32 %v42, 0.5
    %v300 = vmul.f32 %v43, 0.5
    %v301 = vadd.f32 %v296, %v299
    %v302 = vadd.f32 %v298, %v300
    %303 = vst [vmem:[#allocation8] sm:$0xff] %v301
    %304 = vst [vmem:[#allocation8 + $0x8] sm:$0xff] %v302
    // Predicated region
    $region18: #{tpu_custom_call.1} parent=1 // pred_check
      _
    $region19: #{tpu_custom_call.1} parent=1 // pred_check_branch
      %306 = sbr.rel (0) target = $region21
    $region20: #{tpu_custom_call.1} parent=1 // pred_region
      %308 = vsyncadd [#allocation5], 0
      %s310 = sshll.u32 [#allocation8], 4
      %s311 = int_to_ptr.vmem [resolvable:$true] %s310
      %s312 = sshll.u32 %s2, 4
      %s313 = int_to_ptr.hbm [resolvable:$true] %s312
      %315 = dma.vmem_to_hbm [thread:$0]  %s311, 256, %s313, [#allocation5]
    $region21: #{tpu_custom_call.1} parent=1 // pred_fallthru
      _
    // Predicated region
    $region22: #{tpu_custom_call.1} parent=1 // pred_check
      _
    $region23: #{tpu_custom_call.1} parent=1 // pred_check_branch
      %317 = sbr.rel (0) target = $region25
    $region24: #{tpu_custom_call.1} parent=1 // pred_region
      %319 = dma.done [#allocation5], 256
    $region25: #{tpu_custom_call.1} parent=1 // pred_fallthru
      _
    %320 = vsyncpa [#allocation4], 1
    %321 = vsyncpa [#allocation7], 1
    %322 = vsyncpa [#allocation5], 1

</llo_original>
